<compile_context>
chip_gen: v7x
topology: tpu7x:2x2x1
jax: 0.10.0
libtpu: 0.0.40
codegen_flags: <defaults>
</compile_context>

<pallas_src>
import jax
import jax.numpy as jnp
from jax import lax
from jax.experimental import pallas as pl
from jax.experimental.pallas import tpu as pltpu

_LANES = 128
_MIN_KERNEL_ELEMS = 8 * _LANES   # below this, pure JAX beats any grid overhead


def _round_up(a: int, b: int) -> int:
    return (a + b - 1) // b * b


def _tpu_config():
    """(num_tensorcores, target_block_bytes) for the local TPU generation."""
    kind = ""
    try:
        kind = jax.devices()[0].device_kind.lower()
    except Exception:
        pass
    if "v5 lite" in kind or "v5e" in kind or "v5lite" in kind:
        # v5e scoped-VMEM default is 16 MiB: 2 x 4 MiB double-buffered is safe.
        return 1, 4 * 1024 * 1024
    if "v6" in kind:
        # v6e scoped default is 32 MiB: 2 x 8 MiB amortises step overhead safely.
        return 1, 8 * 1024 * 1024
    if "v7" in kind or "7x" in kind:
        # Two TensorCores per chip; 2 x 8 MiB double-buffered << 64 MiB VMEM.
        return 2, 8 * 1024 * 1024
    return 1, 4 * 1024 * 1024


def _make_kernel(block_rows, rows, tiles_per_shard, tiles_total,
                 has_partial_last, needs_oob_guard):
    """Build the accumulation kernel. All tiling parameters are static."""
    groups = block_rows // 8

    def accumulate(x_ref, acc_ref, mask_rows, row0):
        x = x_ref[...]
        # |x - 0.5| in the input dtype (bf16 stays packed on the VPU); cast to
        # f32 only for the accumulation adds.
        dev = jnp.abs(x - jnp.asarray(0.5, x.dtype)).astype(jnp.float32)
        if mask_rows:
            r = lax.broadcasted_iota(jnp.int32, (block_rows, 1), 0)
            dev = jnp.where((row0 + r) < rows, dev, 0.0)
        # Full-vreg (8, 128) accumulator: one VPU add per input vreg, no XLU.
        acc_ref[...] += jnp.sum(dev.reshape(groups, 8, _LANES), axis=0)[None]

    def kernel(x_ref, acc_ref):
        p = pl.program_id(0)   # shard ("parallel": one per TensorCore on v7x)
        j = pl.program_id(1)   # reduction step ("arbitrary")

        @pl.when(j == 0)
        def _():
            acc_ref[...] = jnp.zeros_like(acc_ref)

        if not has_partial_last and not needs_oob_guard:
            # Every block is full and in range: no guards on the hot path.
            accumulate(x_ref, acc_ref, False, 0)
        else:
            blk = p * tiles_per_shard + j
            last = tiles_total - 1
            hot_limit = last if has_partial_last else tiles_total

            @pl.when(blk < hot_limit)          # full in-range blocks: no masking
            def _():
                accumulate(x_ref, acc_ref, False, 0)

            if has_partial_last:
                @pl.when(blk == last)          # only the partial last block pays
                def _():
                    accumulate(x_ref, acc_ref, True, last * block_rows)
            # Clamped out-of-range shard steps hit neither branch -> skipped.

    return kernel


def ambiguous_loss(pred_trimap: jax.Array) -> jax.Array:
    """0.5 - mean(|pred_trimap - 0.5|), matching AmbiguousLoss.forward."""
    if not jnp.issubdtype(pred_trimap.dtype, jnp.floating):
        pred_trimap = pred_trimap.astype(jnp.float32)

    n = pred_trimap.size
    flat = pred_trimap.reshape(-1)                      # free for contiguous input

    if n < _MIN_KERNEL_ELEMS:                           # tiny (or empty) input
        return (jnp.float32(0.5)
                - jnp.mean(jnp.abs(flat.astype(jnp.float32) - 0.5)))

    rows = n // _LANES
    tail_len = n - rows * _LANES

    # Lane-dense body; when n % 128 == 0 this reshape is a pure bitcast (no copy).
    body = flat if tail_len == 0 else flat[: rows * _LANES]
    mat = body.reshape(rows, _LANES)

    num_tc, block_bytes = _tpu_config()

    itemsize = jnp.dtype(mat.dtype).itemsize
    sub_mult = max(8, 32 // itemsize)                   # 8 (f32), 16 (bf16), 32 (fp8)
    target_rows = max(sub_mult,
                      (block_bytes // (_LANES * itemsize)) // sub_mult * sub_mult)
    block_rows = min(target_rows, _round_up(rows, sub_mult))

    tiles_total = pl.cdiv(rows, block_rows)
    num_shards = max(1, min(num_tc, tiles_total))
    tiles_per_shard = pl.cdiv(tiles_total, num_shards)
    has_partial_last = (rows % block_rows) != 0
    needs_oob_guard = (tiles_per_shard * num_shards) != tiles_total

    if needs_oob_guard:
        def in_index_map(p, j):
            # Clamp so shard steps past the end stay in bounds; those steps are
            # skipped in-kernel via their (unclamped) logical block index.
            return (jnp.minimum(p * tiles_per_shard + j, tiles_total - 1), 0)
    else:
        def in_index_map(p, j):
            return (p * tiles_per_shard + j, 0)

    # TODO(synk): verify on v7x that the leading "parallel" axis really lands one
    # shard per TensorCore; if not, switch it to pltpu.CORE_PARALLEL.
    partials = pl.pallas_call(
        _make_kernel(block_rows, rows, tiles_per_shard, tiles_total,
                     has_partial_last, needs_oob_guard),
        out_shape=jax.ShapeDtypeStruct((num_shards, 8, _LANES), jnp.float32),
        grid=(num_shards, tiles_per_shard),
        in_specs=[pl.BlockSpec((block_rows, _LANES), in_index_map)],
        out_specs=pl.BlockSpec((1, 8, _LANES), lambda p, j: (p, 0, 0)),
        compiler_params=pltpu.CompilerParams(
            dimension_semantics=("parallel", "arbitrary")),
    )(mat)

    total = jnp.sum(partials)                           # tiny sublane/lane epilogue
    if tail_len:                                        # < 128 leftover elements
        tail = flat[rows * _LANES:]
        total = total + jnp.sum(jnp.abs(tail.astype(jnp.float32) - 0.5))

    return jnp.float32(0.5) - total / jnp.float32(n)


if __name__ == "__main__":
    key = jax.random.PRNGKey(0)

    # NCHW input, values in [0, 1] like a predicted trimap (n % 128 == 0 path).
    x = jax.random.uniform(key, (2, 4, 16, 16), dtype=jnp.float32)
    out = jax.block_until_ready(ambiguous_loss(x))
    ref = jnp.float32(0.5) - jnp.mean(jnp.abs(x - 0.5))
    assert jnp.allclose(out, ref, atol=1e-5), (out, ref)

    # Ragged size (n % 128 != 0): exercises the masked last block + JAX tail sum.
    x2 = jax.random.uniform(jax.random.PRNGKey(0), (5, 3, 17, 13), dtype=jnp.float32)
    out2 = jax.block_until_ready(ambiguous_loss(x2))
    ref2 = jnp.float32(0.5) - jnp.mean(jnp.abs(x2 - 0.5))
    assert jnp.allclose(out2, ref2, atol=1e-5), (out2, ref2)

    print("KERNEL_OK")
</pallas_src>

<mosaic_0001>
module attributes {stable_mosaic.version = 11 : i64} {
  func.func @kernel(%arg0: i32, %arg1: i32, %arg2: memref<16x128xf32, #tpu.memory_space<vmem>>, %arg3: memref<1x8x128xf32, #tpu.memory_space<vmem>>) attributes {dimension_semantics = [#tpu.dimension_semantics<parallel>, #tpu.dimension_semantics<arbitrary>], iteration_bounds = array<i64: 1, 1>, scalar_prefetch = 0 : i64, scratch_operands = 0 : i64, tpu.core_type = #tpu.core_type<tc>, window_params = [{transform_indices = @transform_0, window_bounds = array<i64: 16, 128>}, {transform_indices = @transform_1, window_bounds = array<i64: 1, 8, 128>}]} {
    %c0_i32 = arith.constant 0 : i32
    %0 = arith.cmpi eq, %arg1, %c0_i32 : i32
    %1 = arith.extui %0 : i1 to i32
    %c0_i32_0 = arith.constant 0 : i32
    %2 = arith.cmpi ne, %1, %c0_i32_0 : i32
    scf.if %2 {
      %cst_9 = arith.constant 0.000000e+00 : f32
      %13 = vector.broadcast %cst_9 : f32 to vector<1x8x128xf32>
      %c0_10 = arith.constant 0 : index
      %c0_11 = arith.constant 0 : index
      %c0_12 = arith.constant 0 : index
      %14 = vector.load %arg3[%c0_10, %c0_11, %c0_12] : memref<1x8x128xf32, #tpu.memory_space<vmem>>, vector<1x8x128xf32>
      tpu.vector_store %arg3[%c0_10, %c0_11, %c0_12], %13 {strides = array<i32>} : memref<1x8x128xf32, #tpu.memory_space<vmem>>, vector<1x8x128xf32>,
    } else {
    }
    %c0 = arith.constant 0 : index
    %c0_1 = arith.constant 0 : index
    %3 = vector.load %arg2[%c0, %c0_1] : memref<16x128xf32, #tpu.memory_space<vmem>>, vector<16x128xf32>
    %cst = arith.constant 5.000000e-01 : f32
    %4 = vector.broadcast %cst : f32 to vector<16x128xf32>
    %5 = arith.subf %3, %4 : vector<16x128xf32>
    %6 = math.absf %5 : vector<16x128xf32>
    %c0_2 = arith.constant 0 : index
    %c0_3 = arith.constant 0 : index
    %c0_4 = arith.constant 0 : index
    %7 = vector.load %arg3[%c0_2, %c0_3, %c0_4] : memref<1x8x128xf32, #tpu.memory_space<vmem>>, vector<1x8x128xf32>
    %8 = vector.shape_cast %6 : vector<16x128xf32> to vector<2x8x128xf32>
    %cst_5 = arith.constant dense<0.000000e+00> : vector<8x128xf32>
    %9 = vector.multi_reduction <add>, %8, %cst_5 [0] : vector<2x8x128xf32> to vector<8x128xf32>
    %10 = vector.shape_cast %9 : vector<8x128xf32> to vector<1x8x128xf32>
    %11 = arith.addf %7, %10 : vector<1x8x128xf32>
    %c0_6 = arith.constant 0 : index
    %c0_7 = arith.constant 0 : index
    %c0_8 = arith.constant 0 : index
    %12 = vector.load %arg3[%c0_6, %c0_7, %c0_8] : memref<1x8x128xf32, #tpu.memory_space<vmem>>, vector<1x8x128xf32>
    tpu.vector_store %arg3[%c0_6, %c0_7, %c0_8], %11 {strides = array<i32>} : memref<1x8x128xf32, #tpu.memory_space<vmem>>, vector<1x8x128xf32>,
    return
  }
  func.func @transform_0(%arg0: i32, %arg1: i32) -> (i32, i32) {
    %c1_i32 = arith.constant 1 : i32
    %0 = arith.muli %arg0, %c1_i32 : i32
    %1 = arith.addi %0, %arg1 : i32
    %c0_i32 = arith.constant 0 : i32
    %c0_i32_0 = arith.constant 0 : i32
    return %1, %c0_i32 : i32, i32
  }
  func.func @transform_1(%arg0: i32, %arg1: i32) -> (i32, i32, i32) {
    %c0_i32 = arith.constant 0 : i32
    %c0_i32_0 = arith.constant 0 : i32
    %c0_i32_1 = arith.constant 0 : i32
    return %arg0, %c0_i32, %c0_i32_0 : i32, i32, i32
  }
}

</mosaic_0001>

<llo_original>
// kernel: tpu_custom_call.1
$region0: #{tpu_custom_call.1}
  #allocation0 [shape = 'u32[]', space=smem, size = 0x4, offset = 0x4, fixed_abs, tag = 'smem constant byte address 0x4 - core index']
  #allocation1 [shape = 'u32[144,128]{1,0:T(1,128)}', space=vmem, size = 0x12000, scoped, tag = 'internal scratch']
  %s0 = inlined_call_operand.hbm [shape: f32[16,128], index: 0, kind: input, shape index: {}]
  %s1 = inlined_call_operand.hbm [shape: f32[1,8,128], index: 1, kind: output, shape index: {}]
  %s2 = sld [smem:[#allocation0]]
  $region22: #{tpu_custom_call.1} parent=0
    _
  %s4 = ssub.s32 1, %s2
  %s5 = scalar_select 0, %s4, %s2
  $region1: #{tpu_custom_call.1} parent=0
    #allocation2 [shape = 'u8[8192]{0}', space=vmem, size = 0x2000, scoped, tag = 'input window, operand 0, single buffered']
    #allocation3 [shape = 's32[1]{0}', space=sflag, size = 0x4, scoped, tag = 'scoped memory for tpu_custom_call.1']
    #allocation4 [shape = 's32[1]{0}', space=sflag, size = 0x4, scoped, tag = 'scoped memory for tpu_custom_call.1']
    #allocation5 [shape = 'u8[4096]{0}', space=vmem, size = 0x1000, scoped, tag = 'output window, operand 0, single buffered']
    %6 = vsyncpa [#allocation3], 0
    %7 = vsyncpa [#allocation4], 0
    // Predicated region
    $region2: #{tpu_custom_call.1} parent=1 // pred_check
      _
    $region3: #{tpu_custom_call.1} parent=1 // pred_check_branch
      %9 = sbr.rel (0) target = $region5
    $region4: #{tpu_custom_call.1} parent=1 // pred_region
      %s10 = sadd.s32 0, 0
      %s11 = smul.u32 2, %s10
      %s13 = ssub.s32 256, 256
      %14 = vsyncadd [#allocation3], %s13
      %s15 = smul.addr %s11, 128
      %s16 = scalar_lea.hbm %s0, %s15
      %s17 = sshll.u32 [#allocation2], 4
      %s18 = int_to_ptr.vmem [resolvable:$true] %s17
      %23 = dma.hbm_to_vmem [thread:$0]  %s16, 256, %s18, [#allocation3], 128, 128, 8
    $region5: #{tpu_custom_call.1} parent=1 // pred_fallthru
      _
    // Predicated region
    $region6: #{tpu_custom_call.1} parent=1 // pred_check
      _
    $region7: #{tpu_custom_call.1} parent=1 // pred_check_branch
      %25 = sbr.rel (0) target = $region9
    $region8: #{tpu_custom_call.1} parent=1 // pred_region
      %26 = dma.done [#allocation3], 256
    $region9: #{tpu_custom_call.1} parent=1 // pred_fallthru
      _
    %s27 = sadd.s32 0, 0
    %s28 = smul.u32 2, %s27
    %p29 = scmp.eq.s32.totalorder 0, 0
    // Predicated region
    $region10: #{tpu_custom_call.1} parent=1 // pred_check
      %p30 = pneg %p29
    $region11: #{tpu_custom_call.1} parent=1 // pred_check_branch
      %32 = sbr.rel (%p30) target = $region13
    $region12: #{tpu_custom_call.1} parent=1 // pred_region
      %33 = vst [vmem:[#allocation5] sm:$0xff] 0.0
    $region13: #{tpu_custom_call.1} parent=1 // pred_fallthru
      _
    %v34 = vld [vmem:[#allocation2] sm:$0xff]
    %v35 = vld [vmem:[#allocation2 + $0x8] sm:$0xff]
    %v36 = vsub.f32 %v34, 0.5
    %v37 = vsub.f32 %v35, 0.5
    %v38 = vand.u32 2147483647, %v36
    %v39 = vand.u32 2147483647, %v37
    %v40 = vld [vmem:[#allocation5] sm:$0xff]
    %v41 = vadd.f32 %v38, %v39
    %v42 = vadd.f32 %v40, %v41
    %43 = vst [vmem:[#allocation5] sm:$0xff] %v42
    // Predicated region
    $region14: #{tpu_custom_call.1} parent=1 // pred_check
      _
    $region15: #{tpu_custom_call.1} parent=1 // pred_check_branch
      %45 = sbr.rel (0) target = $region17
    $region16: #{tpu_custom_call.1} parent=1 // pred_region
      %s47 = ssub.s32 128, 128
      %48 = vsyncadd [#allocation4], %s47
      %s50 = sshll.u32 [#allocation5], 4
      %s51 = int_to_ptr.vmem [resolvable:$true] %s50
      %53 = dma.vmem_to_hbm [thread:$0]  %s51, 128, %s1, [#allocation4]
    $region17: #{tpu_custom_call.1} parent=1 // pred_fallthru
      _
    // Predicated region
    $region18: #{tpu_custom_call.1} parent=1 // pred_check
      _
    $region19: #{tpu_custom_call.1} parent=1 // pred_check_branch
      %55 = sbr.rel (0) target = $region21
    $region20: #{tpu_custom_call.1} parent=1 // pred_region
      %56 = dma.done [#allocation4], 128
    $region21: #{tpu_custom_call.1} parent=1 // pred_fallthru
      _
    %57 = vsyncpa [#allocation3], 1
    %58 = vsyncpa [#allocation4], 1

</llo_original>
